<compile_context>
chip_gen: v6e
topology: v6e:2x2x1
jax: 0.10.0
libtpu: 0.0.40
codegen_flags: <defaults>
</compile_context>

<pallas_src>
import math

import jax
import jax.numpy as jnp
from jax.experimental import pallas as pl
from jax.experimental.pallas import tpu as pltpu

_LANES = 128
_ROW_GRANULE = 32               # multiple of every dtype's sublane tile (f32:8, bf16:16, int8:32)
_MAX_BLOCK_ROWS = 8192
_MAX_VMEM_PER_IN_BUF = 4 * 1024 * 1024   # lane-padded VMEM per input buffer (x2 for double buffer)
_MIN_GRID_STEPS = 4             # keep >=2 (ideally 4+) grid steps so v7x megacore can split work
_MIN_PALLAS_BATCH = 100_000     # below this, plain XLA beats kernel-launch + glue overhead
_PALLAS_DTYPES = (jnp.dtype(jnp.float32), jnp.dtype(jnp.bfloat16))


def _round_up(x: int, m: int) -> int:
    return ((x + m - 1) // m) * m


def _reservoir_term_kernel(ns_ref, done_ref):
    """done = (next_state[:, -1] >= 1.0) for one block of batch rows.

    ns_ref:   (block_rows, state_dim) in next_state's native dtype (VMEM)
    done_ref: (block_rows, 1) int8 (VMEM); 1 = done, 0 = not done
    """
    d = ns_ref.shape[-1]
    last = ns_ref[:, d - 1:d]                      # static lane slice, no relayout
    done_ref[...] = (last >= 1.0).astype(jnp.int8)  # compare in native dtype


def reservoir_termination(state, action, next_state, *, force_pallas=None):
    """JAX equivalent of ReservoirTermination.forward."""
    del state, action  # unused by this termination function (matches torch)

    lead_shape = next_state.shape[:-1]
    state_dim = next_state.shape[-1]
    n = math.prod(lead_shape) if lead_shape else 1
    dtype = jnp.dtype(next_state.dtype)

    pallas_ok = (n >= _ROW_GRANULE) and (state_dim >= 1) and (dtype in _PALLAS_DTYPES)
    if force_pallas is None:
        use_pallas = pallas_ok and n >= _MIN_PALLAS_BATCH
    else:
        use_pallas = pallas_ok and bool(force_pallas)

    if not use_pallas:
        # Plain-JAX bypass: small/empty batches or unsupported dtypes. XLA's
        # fused elementwise compare is already at roofline for these sizes.
        return next_state[..., -1] >= 1.0

    x = next_state.reshape(n, state_dim)  # free reshape (contiguous, no data movement)

    # Block-row sizing: as big as ~_MAX_VMEM_PER_IN_BUF of (lane-padded) VMEM
    # allows, capped at _MAX_BLOCK_ROWS, and small enough that the grid has at
    # least _MIN_GRID_STEPS steps for v7x megacore sharding.
    lanes_padded = _round_up(state_dim, _LANES)
    rows_by_vmem = _MAX_VMEM_PER_IN_BUF // (lanes_padded * dtype.itemsize)
    rows_by_vmem = max(_ROW_GRANULE, (rows_by_vmem // _ROW_GRANULE) * _ROW_GRANULE)
    rows_for_steps = _round_up(pl.cdiv(n, _MIN_GRID_STEPS), _ROW_GRANULE)
    block_rows = max(_ROW_GRANULE, min(_MAX_BLOCK_ROWS, rows_by_vmem, rows_for_steps))
    grid = (pl.cdiv(n, block_rows),)  # ragged trailing block is masked by Pallas

    done_i8 = pl.pallas_call(
        _reservoir_term_kernel,
        out_shape=jax.ShapeDtypeStruct((n, 1), jnp.int8),
        grid_spec=pltpu.PrefetchScalarGridSpec(
            num_scalar_prefetch=0,
            grid=grid,
            in_specs=[pl.BlockSpec((block_rows, state_dim), lambda i: (i, 0))],
            out_specs=pl.BlockSpec((block_rows, 1), lambda i: (i, 0)),
        ),
        compiler_params=pltpu.CompilerParams(
            dimension_semantics=("parallel",),
            vmem_limit_bytes=32 * 1024 * 1024,
        ),
        cost_estimate=pl.CostEstimate(
            flops=n,
            transcendentals=0,
            bytes_accessed=n * state_dim * dtype.itemsize + n,
        ),
    )(x)

    # Tiny XLA glue: restore batch shape and view the int8 mask as bool.
    return done_i8.reshape(lead_shape).astype(jnp.bool_)


if __name__ == "__main__":
    key = jax.random.PRNGKey(0)
    k_state, k_action, k_next = jax.random.split(key, 3)

    state_dim = 9    # Reservoir: 8 reservoir levels + time component (last)
    action_dim = 8

    # Case 1: flat batch, not a multiple of the row granule -> forced Pallas
    #         path, exercises a ragged trailing block (grid of 2 steps).
    b1 = 53
    state1 = jax.random.uniform(k_state, (b1, state_dim), minval=0.0, maxval=2.0)
    action1 = jax.random.uniform(k_action, (b1, action_dim), minval=0.0, maxval=1.0)
    next_state1 = jax.random.uniform(k_next, (b1, state_dim), minval=0.5, maxval=1.5)
    done1 = jax.block_until_ready(
        reservoir_termination(state1, action1, next_state1, force_pallas=True))
    ref1 = next_state1[..., -1] >= 1.0
    assert done1.shape == (b1,) and done1.dtype == jnp.bool_
    assert bool(jnp.all(done1 == ref1))

    # Case 2: multi-dim lead shape in bf16 -> forced Pallas path, native-dtype
    #         compare inside the kernel.
    lead2 = (4, 16)
    next_state2 = jax.random.uniform(jax.random.PRNGKey(1), lead2 + (state_dim,),
                                     minval=0.5, maxval=1.5).astype(jnp.bfloat16)
    state2 = jnp.zeros(lead2 + (state_dim,), jnp.bfloat16)
    action2 = jnp.zeros(lead2 + (action_dim,), jnp.bfloat16)
    done2 = jax.block_until_ready(
        reservoir_termination(state2, action2, next_state2, force_pallas=True))
    ref2 = next_state2[..., -1] >= 1.0
    assert done2.shape == lead2 and done2.dtype == jnp.bool_
    assert bool(jnp.all(done2 == ref2))

    # Case 3: tiny batch -> auto path takes the plain-JAX bypass (by design).
    b3 = 8
    next_state3 = jax.random.uniform(jax.random.PRNGKey(2), (b3, state_dim),
                                     minval=0.5, maxval=1.5)
    done3 = jax.block_until_ready(
        reservoir_termination(jnp.zeros((b3, state_dim)),
                              jnp.zeros((b3, action_dim)),
                              next_state3))
    assert bool(jnp.all(done3 == (next_state3[..., -1] >= 1.0)))

    print("KERNEL_OK")
</pallas_src>

<mosaic_0001>
module attributes {stable_mosaic.version = 11 : i64} {
  func.func @_reservoir_term_kernel(%arg0: i32, %arg1: memref<32x9xf32, #tpu.memory_space<vmem>>, %arg2: memref<32x1xi8, #tpu.memory_space<vmem>>) attributes {dimension_semantics = [#tpu.dimension_semantics<parallel>], iteration_bounds = array<i64: 2>, scalar_prefetch = 0 : i64, scratch_operands = 0 : i64, tpu.core_type = #tpu.core_type<tc>, window_params = [{transform_indices = @transform_0, window_bounds = array<i64: 32, 9>}, {transform_indices = @transform_1, window_bounds = array<i64: 32, 1>}]} {
    %c0 = arith.constant 0 : index
    %c8 = arith.constant 8 : index
    %0 = vector.load %arg1[%c0, %c8] : memref<32x9xf32, #tpu.memory_space<vmem>>, vector<32x1xf32>
    %cst = arith.constant 1.000000e+00 : f32
    %1 = vector.broadcast %cst : f32 to vector<32x1xf32>
    %2 = arith.cmpf oge, %0, %1 : vector<32x1xf32>
    %3 = arith.extui %2 : vector<32x1xi1> to vector<32x1xi8>
    %c0_0 = arith.constant 0 : index
    %c0_1 = arith.constant 0 : index
    %4 = vector.load %arg2[%c0_0, %c0_1] : memref<32x1xi8, #tpu.memory_space<vmem>>, vector<32x1xi8>
    tpu.vector_store %arg2[%c0_0, %c0_1], %3 {strides = array<i32>} : memref<32x1xi8, #tpu.memory_space<vmem>>, vector<32x1xi8>,
    return
  }
  func.func @transform_0(%arg0: i32) -> (i32, i32) {
    %c0_i32 = arith.constant 0 : i32
    %c0_i32_0 = arith.constant 0 : i32
    return %arg0, %c0_i32 : i32, i32
  }
  func.func @transform_1(%arg0: i32) -> (i32, i32) {
    %c0_i32 = arith.constant 0 : i32
    %c0_i32_0 = arith.constant 0 : i32
    return %arg0, %c0_i32 : i32, i32
  }
}

</mosaic_0001>

<llo_original>
// kernel: tpu_custom_call.1
$region0: #{tpu_custom_call.1}
  #allocation0 [shape = 'u32[]', space=smem, size = 0x4, offset = 0x4, fixed_abs, tag = 'smem constant byte address 0x4 - core index']
  #allocation1 [shape = 'u32[144,128]{1,0:T(1,128)}', space=vmem, size = 0x12000, scoped, tag = 'internal scratch']
  %s0 = inlined_call_operand.vmem [shape: f32[53,9], index: 0, kind: input, shape index: {}]
  %s1 = inlined_call_operand.vmem [shape: s8[53,1], index: 1, kind: output, shape index: {}]
  %s2 = sld [smem:[#allocation0]]
  $region81: #{tpu_custom_call.1} parent=0
    _
  %s4 = ssub.s32 1, %s2
  %s5 = scalar_select 0, %s4, %s2
  $region1: #{tpu_custom_call.1} parent=0
    #allocation2 [shape = 'u8[8192]{0}', space=vmem, size = 0x2000, scoped, tag = 'output window, operand 0']
    loop: start=0, step=1, limit=4
    $region2: #{tpu_custom_call.1} parent=1 // loop_pre_header
      _
    $region3: #{tpu_custom_call.1} parent=1 // loop_header
      %s7 = sphi 0, %s11
      %p8 = scmp.ge.s32.totalorder %s7, 4
      %s17 = sphi 0, %s19
      %s20 = sphi 0, %s17
      %s21 = sphi 0, %s20
      %s37 = sphi 0, %s21
      %s43 = sphi 0, %s45
      %s46 = sphi 0, %s43
      %s47 = sphi 0, %s46
      %s63 = sphi 0, %s47
    $region4: #{tpu_custom_call.1} parent=1 // loop_header_branch
      %10 = sbr.rel (%p8) target = $region8
    $region5: #{tpu_custom_call.1} parent=1 // loop_body
      %s12 = ssub.s32 %s7, 1
      %s13 = ssub.s32 %s7, 2
      %s14 = sadd.s32 %s7, 1
      %s15 = ssub.s32 %s7, %s14
      %p16 = scmp.eq.s32.totalorder %s15, 0
      %s18 = sadd.s32 %s17, 1
      %s19 = scalar_select %p16, %s17, %s18
      %p22 = pneg %p16
      %p23 = scmp.eq.s32.totalorder %s7, 1
      %p24 = por %p22, %p23
      %p25 = scmp.ne.s32.totalorder %s17, %s20
      %p26 = scmp.eq.s32.totalorder %s7, 0
      %p27 = por %p25, %p26
      %p28 = scmp.ne.s32.totalorder %s17, %s20
      %p29 = scmp.eq.s32.totalorder %s12, 1
      %p30 = por %p28, %p29
      %p31 = scmp.ne.s32.totalorder %s20, %s21
      %p32 = scmp.eq.s32.totalorder %s12, 0
      %p33 = por %p31, %p32
      %p34 = scmp.ne.s32.totalorder %s20, %s21
      %p35 = scmp.eq.s32.totalorder %s13, 1
      %p36 = por %p34, %p35
      %p38 = scmp.ne.s32.totalorder %s21, %s37
      %p39 = scmp.eq.s32.totalorder %s13, 0
      %p40 = por %p38, %p39
      %s41 = ssub.s32 %s7, %s14
      %p42 = scmp.eq.s32.totalorder %s41, 0
      %s44 = sadd.s32 %s43, 1
      %s45 = scalar_select %p42, %s43, %s44
      %p48 = pneg %p42
      %p49 = scmp.eq.s32.totalorder %s7, 1
      %p50 = por %p48, %p49
      %p51 = scmp.ne.s32.totalorder %s43, %s46
      %p52 = scmp.eq.s32.totalorder %s7, 0
      %p53 = por %p51, %p52
      %p54 = scmp.ne.s32.totalorder %s43, %s46
      %p55 = scmp.eq.s32.totalorder %s12, 1
      %p56 = por %p54, %p55
      %p57 = scmp.ne.s32.totalorder %s46, %s47
      %p58 = scmp.eq.s32.totalorder %s12, 0
      %p59 = por %p57, %p58
      %p60 = scmp.ne.s32.totalorder %s46, %s47
      %p61 = scmp.eq.s32.totalorder %s13, 1
      %p62 = por %p60, %p61
      %p64 = scmp.ne.s32.totalorder %s47, %s63
      %p65 = scmp.eq.s32.totalorder %s13, 0
      %p66 = por %p64, %p65
      %p67 = scmp.le.s32.totalorder 1, %s7
      %p68 = scmp.lt.s32.totalorder %s7, 3
      %p69 = pnand %p67, %p68
      %p70 = pneg %p69
      // Predicated region
      $region9: #{tpu_custom_call.1} parent=5 // pred_check
        _
      $region10: #{tpu_custom_call.1} parent=5 // pred_check_branch
        %72 = sbr.rel (%p69) target = $region12
      $region11: #{tpu_custom_call.1} parent=5 // pred_region
        %s73 = ssub.s32 %s7, 1
      $region12: #{tpu_custom_call.1} parent=5 // pred_fallthru
        _
      %p74 = scmp.lt.s32.totalorder %s7, 2
      // Predicated region
      $region13: #{tpu_custom_call.1} parent=5 // pred_check
        %p75 = pneg %p74
      $region14: #{tpu_custom_call.1} parent=5 // pred_check_branch
        %77 = sbr.rel (%p75) target = $region16
      $region15: #{tpu_custom_call.1} parent=5 // pred_region
        // Predicated region
        $region17: #{tpu_custom_call.1} parent=15 // pred_check
          %p78 = pneg %p27
        $region18: #{tpu_custom_call.1} parent=15 // pred_check_branch
          %80 = sbr.rel (%p78) target = $region20
        $region19: #{tpu_custom_call.1} parent=15 // pred_region
          %s81 = smul.u32 4, %s7
          %s82 = ssub.s32 7, %s81
          %p83 = scmp.lt.s32.totalorder %s82, 4
          %s84 = scalar_select %p83, %s82, 4
          %s85 = smul.u32 128, %s84
          %p86 = scmp.lt.s32.totalorder %s81, 6
          %s87 = scalar_select %p86, %s81, 6
          %s88 = smul.addr %s87, 8
          %s89 = scalar_lea.vmem %s0, %s88
          %s90 = smul.u32 4, %s7
          %s91 = ssub.s32 7, %s90
          %p92 = scmp.lt.s32.totalorder %s91, 4
          %s93 = scalar_select %p92, %s91, 4
          %s94 = smul.u32 128, %s93
        $region20: #{tpu_custom_call.1} parent=15 // pred_fallthru
          _
      $region16: #{tpu_custom_call.1} parent=5 // pred_fallthru
        _
      %p95 = scmp.le.s32.totalorder 1, %s7
      %p96 = scmp.lt.s32.totalorder %s7, 3
      %p97 = pnand %p95, %p96
      %p98 = pneg %p97
      // Predicated region
      $region21: #{tpu_custom_call.1} parent=5 // pred_check
        _
      $region22: #{tpu_custom_call.1} parent=5 // pred_check_branch
        %100 = sbr.rel (%p97) target = $region24
      $region23: #{tpu_custom_call.1} parent=5 // pred_region
        %s101 = ssub.s32 %s7, 1
        %s102 = smul.u32 4, %s12
        %s103 = ssub.s32 7, %s102
        %p104 = scmp.lt.s32.totalorder %s103, 4
        %s105 = scalar_select %p104, %s103, 4
        %s106 = smul.u32 128, %s105
        %p107 = scmp.lt.s32.totalorder %s102, 6
        %s108 = scalar_select %p107, %s102, 6
        %s109 = smul.addr %s108, 8
        %s110 = scalar_lea.vmem %s0, %s109
        %p111 = pneg %p33
        %p112 = pneg %p30
        %p113 = pneg %p59
        %p114 = pneg %p56
        %s115 = sand.u32 %s46, 1
        %s116 = sand.u32 %s46, 1
        %s117 = smul.addr %s116, 8
        %s118 = scalar_lea.vmem [#allocation2], %s117
        %s119 = smul.u32 4, %s12
        %s120 = ssub.s32 7, %s119
        %p121 = scmp.lt.s32.totalorder %s120, 4
        %s122 = scalar_select %p121, %s120, 4
        %s123 = smul.u32 128, %s122
        %p124 = scmp.lt.s32.totalorder %s119, 6
        %s125 = scalar_select %p124, %s119, 6
        %s126 = smul.addr %s125, 8
        %s127 = scalar_lea.vmem %s0, %s126
        %s128 = smul.u32 4, %s12
        %s129 = ssub.s32 7, %s128
        %p130 = scmp.lt.s32.totalorder %s129, 4
        %s131 = scalar_select %p130, %s129, 4
        %s132 = smul.u32 128, %s131
        %s133 = smul.u32 4, %s12
        %s134 = ssub.s32 7, %s133
        %p135 = scmp.lt.s32.totalorder %s134, 4
        %s136 = scalar_select %p135, %s134, 4
        %s137 = smul.u32 32, %s136
        %v140 = vld [vmem:[%s127] sm:$0xff]
        %v141 = vld [vmem:[%s127 + $0x8] sm:$0xff]
        %v142 = vld [vmem:[%s127 + $0x10] sm:$0xff]
        %v143 = vld [vmem:[%s127 + $0x18] sm:$0xff]
        %vm144 = vcmp.ge.f32.partialorder %v140, 1.0
        %vm145 = vcmp.ge.f32.partialorder %v141, 1.0
        %vm146 = vcmp.ge.f32.partialorder %v142, 1.0
        %vm147 = vcmp.ge.f32.partialorder %v143, 1.0
        %vm148 = vmpackc.low %vm144, %vm144
        %vm149 = vmpackc.even %vm148, %vm148
        %vm150 = vmpackc.low %vm145, %vm145
        %vm151 = vmpackc.even %vm150, %vm150
        %vm152 = vmpackc.low %vm146, %vm146
        %vm153 = vmpackc.even %vm152, %vm152
        %vm154 = vmpackc.low %vm147, %vm147
        %vm155 = vmpackc.even %vm154, %vm154
        %v156 = vsel %vm149, 16843009, 0
        %v157 = vsel %vm151, 16843009, 0
        %v158 = vsel %vm153, 16843009, 0
        %v159 = vsel %vm155, 16843009, 0
        %v160 = vunpack.c.0.s8 %v156
        %v161 = vunpack.c.0.s8 %v157
        %v162 = vunpack.c.0.s8 %v158
        %v163 = vunpack.c.0.s8 %v159
        %v164 = vpack.c.b16 %v161, %v160
        %v165 = vpack.c.b16 %v163, %v162
        %v166 = vpack.c.b8 %v165, %v164
        %167 = vrot.lane.b32.xlu0 %v166, 120
        %v168 = vpop.permute.xlu0 %167
        %vm169 = vnez %v168
        %v170 = vsel %vm169, 16843009, 0
        %v171 = vunpack.c.0.s8 %v170
        %v172 = vunpack.c.1.s8 %v170
        %v173 = vunpack.c.2.s8 %v170
        %v174 = vunpack.c.3.s8 %v170
        %v175 = vpack.c.b16 %v171, %v171
        %v176 = vpack.c.b8 %v175, %v175
        %v177 = vpack.c.b16 %v172, %v172
        %v178 = vpack.c.b8 %v177, %v177
        %v179 = vpack.c.b16 %v173, %v173
        %v180 = vpack.c.b8 %v179, %v179
        %v181 = vpack.c.b16 %v174, %v174
        %v182 = vpack.c.b8 %v181, %v181
        %vm183 = vcmask 1024
        %184 = vst.msk [vmem:[%s118] sm:$0x3] %vm183, %v176
        %185 = vst.msk [vmem:[%s118 + $0x2] sm:$0x3] %vm183, %v178
        %186 = vst.msk [vmem:[%s118 + $0x4] sm:$0x3] %vm183, %v180
        %187 = vst.msk [vmem:[%s118 + $0x6] sm:$0x3] %vm183, %v182
        %s188 = sand.u32 %s46, 1
        %s189 = sand.u32 %s46, 1
        %s190 = smul.addr %s189, 8
        %s191 = scalar_lea.vmem [#allocation2], %s190
        // Predicated region
        $region25: #{tpu_custom_call.1} parent=23 // pred_check
          %p192 = pneg %p56
        $region26: #{tpu_custom_call.1} parent=23 // pred_check_branch
          %194 = sbr.rel (%p192) target = $region28
        $region27: #{tpu_custom_call.1} parent=23 // pred_region
          %s195 = smul.u32 4, %s12
          %s196 = ssub.s32 7, %s195
          %p197 = scmp.lt.s32.totalorder %s196, 4
          %s198 = scalar_select %p197, %s196, 4
          %s199 = smul.u32 32, %s198
          %p200 = scmp.ne.s32.totalorder 0, %s199
          %s201 = smul.addr %s195, 2
          %s202 = scalar_lea.vmem %s1, %s201
          // Predicated region
          $region29: #{tpu_custom_call.1} parent=27 // pred_check
            %p203 = pneg %p200
          $region30: #{tpu_custom_call.1} parent=27 // pred_check_branch
            %205 = sbr.rel (%p203) target = $region32
          $region31: #{tpu_custom_call.1} parent=27 // pred_region
            // Predicated region
            $region33: #{tpu_custom_call.1} parent=31 // pred_check
              _
            $region34: #{tpu_custom_call.1} parent=31 // pred_check_branch
              %207 = sbr.rel target = $region36
            $region35: #{tpu_custom_call.1} parent=31 // pred_region
              // Predicated region
              $region55: #{tpu_custom_call.1} parent=35 // pred_check
                _
              $region56: #{tpu_custom_call.1} parent=35 // pred_check_branch
                %263 = sbr.rel (0) target = $region58
              $region57: #{tpu_custom_call.1} parent=35 // pred_region
                %s265 = ssub.s32 4, 1
                %s266 = sshrl.u32 %s198, 2
                // While loop
                $region59: #{tpu_custom_call.1} parent=57 // loop_pre_header
                  _
                $region60: #{tpu_custom_call.1} parent=57 // loop_header
                  %s268 = sphi 0, %s270
                  %p269 = scmp.ge.s32.totalorder %s268, %s266
                  %s273 = sphi 0, %s286
                  %s274 = sphi %s191, %s289
                  %s275 = sphi %s202, %s290
                $region61: #{tpu_custom_call.1} parent=57 // loop_header_branch
                  %272 = sbr.rel (%p269) target = $region65
                $region62: #{tpu_custom_call.1} parent=57 // loop_body
                  %v276 = vld [vmem:[%s274] sm:%s265]
                  %277 = vst [vmem:[%s275] sm:%s265] %v276
                  %v278 = vld [vmem:[%s274 + $0x2] sm:%s265]
                  %279 = vst [vmem:[%s275 + $0x2] sm:%s265] %v278
                  %v280 = vld [vmem:[%s274 + $0x4] sm:%s265]
                  %281 = vst [vmem:[%s275 + $0x4] sm:%s265] %v280
                  %v282 = vld [vmem:[%s274 + $0x6] sm:%s265]
                  %283 = vst [vmem:[%s275 + $0x6] sm:%s265] %v282
                  %s284 = sadd.s32 1, %s273
                  %p285 = scmp.ge.s32.totalorder %s284, %s266
                  %s286 = scalar_select %p285, 0, %s284
                  %s287 = smul.u32 %s286, 8
                  %s288 = smul.u32 %s286, 8
                  %s289 = scalar_lea.vmem %s191, %s287 [#allocation2]
                  %s290 = scalar_lea.vmem %s202, %s288
                $region63: #{tpu_custom_call.1} parent=57 // loop_footer
                  %s270 = sadd.s32 %s268, 1
                $region64: #{tpu_custom_call.1} parent=57 // loop_footer_branch
                  %267 = sbr.rel target = $region60
                $region65: #{tpu_custom_call.1} parent=57 // loop_exit
                  _
                %s291 = sshrl.u32 %s198, 2
                %s292 = sand.u32 %s198, 3
                %s293 = smul.u32 %s291, 4
                %s294 = smul.u32 2, %s293
                %s295 = scalar_lea.vmem %s191, %s294 [#allocation2]
                %s296 = smul.u32 2, %s293
                %s297 = scalar_lea.vmem %s202, %s296
                // While loop
                $region66: #{tpu_custom_call.1} parent=57 // loop_pre_header
                  _
                $region67: #{tpu_custom_call.1} parent=57 // loop_header
                  %s299 = sphi 0, %s301
                  %p300 = scmp.ge.s32.totalorder %s299, %s292
                  %s304 = sphi 0, %s311
                  %s305 = sphi %s295, %s314
                  %s306 = sphi %s297, %s315
                $region68: #{tpu_custom_call.1} parent=57 // loop_header_branch
                  %303 = sbr.rel (%p300) target = $region72
                $region69: #{tpu_custom_call.1} parent=57 // loop_body
                  %v307 = vld [vmem:[%s305] sm:%s265]
                  %308 = vst [vmem:[%s306] sm:%s265] %v307
                  %s309 = sadd.s32 1, %s304
                  %p310 = scmp.ge.s32.totalorder %s309, %s292
                  %s311 = scalar_select %p310, 0, %s309
                  %s312 = smul.u32 %s311, 2
                  %s313 = smul.u32 %s311, 2
                  %s314 = scalar_lea.vmem %s295, %s312 [#allocation2]
                  %s315 = scalar_lea.vmem %s297, %s313
                $region70: #{tpu_custom_call.1} parent=57 // loop_footer
                  %s301 = sadd.s32 %s299, 1
                $region71: #{tpu_custom_call.1} parent=57 // loop_footer_branch
                  %298 = sbr.rel target = $region67
                $region72: #{tpu_custom_call.1} parent=57 // loop_exit
                  _
              $region58: #{tpu_custom_call.1} parent=35 // pred_fallthru
                _
            $region36: #{tpu_custom_call.1} parent=31 // pred_fallthru
              _
            // Predicated region
            $region37: #{tpu_custom_call.1} parent=31 // pred_check
              _
            $region38: #{tpu_custom_call.1} parent=31 // pred_check_branch
              %209 = sbr.rel (0) target = $region40
            $region39: #{tpu_custom_call.1} parent=31 // pred_region
              %s211 = ssub.s32 4, 1
              %s212 = sshrl.u32 %s198, 2
              // While loop
              $region41: #{tpu_custom_call.1} parent=39 // loop_pre_header
                _
              $region42: #{tpu_custom_call.1} parent=39 // loop_header
                %s214 = sphi 0, %s216
                %p215 = scmp.ge.s32.totalorder %s214, %s212
                %s219 = sphi 0, %s232
                %s220 = sphi %s191, %s235
                %s221 = sphi %s202, %s236
              $region43: #{tpu_custom_call.1} parent=39 // loop_header_branch
                %218 = sbr.rel (%p215) target = $region47
              $region44: #{tpu_custom_call.1} parent=39 // loop_body
                %v222 = vld [vmem:[%s220] sm:%s211]
                %223 = vst [vmem:[%s221] sm:%s211] %v222
                %v224 = vld [vmem:[%s220 + $0x2] sm:%s211]
                %225 = vst [vmem:[%s221 + $0x2] sm:%s211] %v224
                %v226 = vld [vmem:[%s220 + $0x4] sm:%s211]
                %227 = vst [vmem:[%s221 + $0x4] sm:%s211] %v226
                %v228 = vld [vmem:[%s220 + $0x6] sm:%s211]
                %229 = vst [vmem:[%s221 + $0x6] sm:%s211] %v228
                %s230 = sadd.s32 1, %s219
                %p231 = scmp.ge.s32.totalorder %s230, %s212
                %s232 = scalar_select %p231, 0, %s230
                %s233 = smul.u32 %s232, 8
                %s234 = smul.u32 %s232, 8
                %s235 = scalar_lea.vmem %s191, %s233 [#allocation2]
                %s236 = scalar_lea.vmem %s202, %s234
              $region45: #{tpu_custom_call.1} parent=39 // loop_footer
                %s216 = sadd.s32 %s214, 1
              $region46: #{tpu_custom_call.1} parent=39 // loop_footer_branch
                %213 = sbr.rel target = $region42
              $region47: #{tpu_custom_call.1} parent=39 // loop_exit
                _
              %s237 = sshrl.u32 %s198, 2
              %s238 = sand.u32 %s198, 3
              %s239 = smul.u32 %s237, 4
              %s240 = smul.u32 2, %s239
              %s241 = scalar_lea.vmem %s191, %s240 [#allocation2]
              %s242 = smul.u32 2, %s239
              %s243 = scalar_lea.vmem %s202, %s242
              // While loop
              $region48: #{tpu_custom_call.1} parent=39 // loop_pre_header
                _
              $region49: #{tpu_custom_call.1} parent=39 // loop_header
                %s245 = sphi 0, %s247
                %p246 = scmp.ge.s32.totalorder %s245, %s238
                %s250 = sphi 0, %s257
                %s251 = sphi %s241, %s260
                %s252 = sphi %s243, %s261
              $region50: #{tpu_custom_call.1} parent=39 // loop_header_branch
                %249 = sbr.rel (%p246) target = $region54
              $region51: #{tpu_custom_call.1} parent=39 // loop_body
                %v253 = vld [vmem:[%s251] sm:%s211]
                %254 = vst [vmem:[%s252] sm:%s211] %v253
                %s255 = sadd.s32 1, %s250
                %p256 = scmp.ge.s32.totalorder %s255, %s238
                %s257 = scalar_select %p256, 0, %s255
                %s258 = smul.u32 %s257, 2
                %s259 = smul.u32 %s257, 2
                %s260 = scalar_lea.vmem %s241, %s258 [#allocation2]
                %s261 = scalar_lea.vmem %s243, %s259
              $region52: #{tpu_custom_call.1} parent=39 // loop_footer
                %s247 = sadd.s32 %s245, 1
              $region53: #{tpu_custom_call.1} parent=39 // loop_footer_branch
                %244 = sbr.rel target = $region49
              $region54: #{tpu_custom_call.1} parent=39 // loop_exit
                _
            $region40: #{tpu_custom_call.1} parent=31 // pred_fallthru
              _
          $region32: #{tpu_custom_call.1} parent=27 // pred_fallthru
            _
          %316 = vnop
        $region28: #{tpu_custom_call.1} parent=23 // pred_fallthru
          _
      $region24: #{tpu_custom_call.1} parent=5 // pred_fallthru
        _
      %p317 = scmp.le.s32.totalorder 2, %s7
      // Predicated region
      $region73: #{tpu_custom_call.1} parent=5 // pred_check
        %p318 = pneg %p317
      $region74: #{tpu_custom_call.1} parent=5 // pred_check_branch
        %320 = sbr.rel (%p318) target = $region76
      $region75: #{tpu_custom_call.1} parent=5 // pred_region
        %s321 = ssub.s32 %s7, 2
        // Predicated region
        $region77: #{tpu_custom_call.1} parent=75 // pred_check
          %p322 = pneg %p62
        $region78: #{tpu_custom_call.1} parent=75 // pred_check_branch
          %324 = sbr.rel (%p322) target = $region80
        $region79: #{tpu_custom_call.1} parent=75 // pred_region
          %s325 = sand.u32 %s47, 1
          %s326 = sand.u32 %s47, 1
          %s327 = smul.addr %s326, 8
          %s328 = scalar_lea.vmem [#allocation2], %s327
        $region80: #{tpu_custom_call.1} parent=75 // pred_fallthru
          _
      $region76: #{tpu_custom_call.1} parent=5 // pred_fallthru
        _
    $region6: #{tpu_custom_call.1} parent=1 // loop_footer
      %s11 = sadd.s32 1, %s7
    $region7: #{tpu_custom_call.1} parent=1 // loop_footer_branch
      %6 = sbr.rel target = $region3
    $region8: #{tpu_custom_call.1} parent=1 // loop_exit
      _

</llo_original>
